<compile_context>
chip_gen: v7x
topology: tpu7x:2x2x1
jax: 0.10.0
libtpu: 0.0.40
codegen_flags: <defaults>
</compile_context>

<pallas_src>
import functools

import jax
import jax.numpy as jnp
from jax.experimental import pallas as pl
from jax.experimental.pallas import tpu as pltpu

_CLAMP_MIN = 1e-05
_CLAMP_MAX = 1000000.0
_LANE = 128


def _mean_act_kernel(x_ref, o_ref):
    # Elementwise: exp in f32, clamp, cast back to the output dtype.
    # Note: a partial last row-block reads sublanes past the real data; their
    # exp() may be inf/NaN, but Pallas masks the out-of-bounds writeback, so
    # do NOT "fix" this by padding (that would add HBM passes).
    y = jnp.exp(x_ref[...].astype(jnp.float32))
    o_ref[...] = jnp.clip(y, _CLAMP_MIN, _CLAMP_MAX).astype(o_ref.dtype)


def _sublane_multiple(dtype) -> int:
    itemsize = jnp.dtype(dtype).itemsize
    if itemsize >= 4:
        return 8
    if itemsize == 2:
        return 16
    return 32


def _round_up(v: int, m: int) -> int:
    return ((v + m - 1) // m) * m


@functools.lru_cache(maxsize=1)
def _tpu_generation_defaults():
    """Generation-aware (target_block_bytes, vmem_limit_bytes)."""
    try:
        kind = jax.devices()[0].device_kind.lower()
    except Exception:
        kind = ""
    if "7x" in kind or "v7" in kind or "tpu7" in kind:
        # v7x: ~3.2 TB/s per TC -> big blocks pay; 64 MiB physical VMEM, so
        # raise the scoped limit (4 bufs x 7 MiB = 28 MiB << 48 MiB < 64 MiB).
        return 7 << 20, 48 << 20
    if "v6" in kind or "6e" in kind:
        # v6e: 4 bufs x 4 MiB = 16 MiB fits the 32 MiB default scoped limit.
        return 4 << 20, 32 << 20
    # v5e (and unknown generations): default scoped limit is only 16 MiB, so
    # stay at 3 MiB blocks and be explicit (physical VMEM is 128 MiB).
    return 3 << 20, 24 << 20


def _xla_mean_act(x: jax.Array) -> jax.Array:
    y = jnp.exp(x.astype(jnp.float32))
    return jnp.clip(y, _CLAMP_MIN, _CLAMP_MAX).astype(x.dtype)


def mean_act(
    x: jax.Array,
    *,
    block_cols: int = 1024,
    block_rows: int | None = None,
    target_block_bytes: int | None = None,
    use_xla_fast_path: bool = True,
    xla_fast_path_bytes: int = 1 << 20,
    donate: bool = False,
) -> jax.Array:
    """Elementwise clamp(exp(x), 1e-5, 1e6) via a Pallas TPU kernel."""
    orig_shape = x.shape
    dtype = x.dtype
    n = x.size
    if n == 0:
        return x

    itemsize = jnp.dtype(dtype).itemsize
    nbytes = n * itemsize

    gen_block_bytes, gen_vmem_limit = _tpu_generation_defaults()
    if target_block_bytes is None:
        target_block_bytes = gen_block_bytes

    # Tiny arrays: pure-XLA path (kernel launch + reshapes would dominate).
    if use_xla_fast_path and nbytes < xla_fast_path_bytes:
        return _xla_mean_act(x)

    sub = _sublane_multiple(dtype)
    max_cols = max(_LANE, (block_cols // _LANE) * _LANE)

    # --- choose a copy-free 2D (rows, cols) view of x -------------------------
    if n % _LANE == 0:
        # Lane-dense path: largest multiple of 128 (<= max_cols) dividing n.
        cols = _LANE
        c = max_cols
        while c >= _LANE:
            if n % c == 0:
                cols = c
                break
            c -= _LANE
        rows = n // cols
    elif x.ndim >= 2:
        # Ragged element count: keep the trailing dim as a full-extent lane dim
        # (layout-legal), copy-free reshape, no pad / slice HBM round trips.
        cols = orig_shape[-1]
        rows = n // cols
    else:
        # Large ragged 1-D input: a pure-XLA elementwise op already runs at the
        # HBM roofline; avoid any pad+slice passes entirely.
        return _xla_mean_act(x)

    x2d = x.reshape(rows, cols)  # row-major -> copy-free
    cols_pad = _round_up(cols, _LANE)

    # Safety: pathological very-wide ragged arrays whose minimal legal tile
    # cannot be double-buffered in VMEM fall back to XLA.
    min_tr = min(sub, rows)
    if 4 * min_tr * cols_pad * itemsize > (gen_vmem_limit * 3) // 4:
        return _xla_mean_act(x)

    # --- choose the row-tile height -------------------------------------------
    if block_rows is not None:
        tr = max(sub, (block_rows // sub) * sub)
    else:
        tr = max(sub, (target_block_bytes // (cols_pad * itemsize) // sub) * sub)

    if tr >= rows:
        if rows >= 2 * sub:
            # Keep at least 2 grid steps so v7x's two TensorCores both engage
            # (dimension_semantics only shards with >= 2 steps) and
            # DMA/compute overlap is preserved for mid-size inputs.
            tr = _round_up(pl.cdiv(rows, 2), sub)
        else:
            tr = rows  # single full-extent block (always layout-legal)
    grid_r = pl.cdiv(rows, tr)  # partial last block handled (masked) by Pallas

    tile_bytes = tr * cols_pad * itemsize
    # 2 arrays (in + out) x 2 buffers (double-buffered) + headroom; never below
    # the generation default.  (Only exceeds it if the caller forces huge tiles.)
    vmem_limit = max(gen_vmem_limit, 4 * tile_bytes + (4 << 20))

    cost = pl.CostEstimate(
        flops=2 * n,                    # clamp ~ 2 cmp/select per element
        transcendentals=n,              # one exp per element
        bytes_accessed=2 * n * itemsize,
    )

    extra_kwargs = {}
    if donate:
        # Input and output slabs have identical shape/dtype -> safe to alias,
        # but ONLY if the caller never reuses x afterwards.  Aliasing saves HBM
        # footprint, not bandwidth (still one read + one write).
        extra_kwargs["input_output_aliases"] = {0: 0}

    out2d = pl.pallas_call(
        _mean_act_kernel,
        out_shape=jax.ShapeDtypeStruct((rows, cols), dtype),
        grid_spec=pl.GridSpec(
            grid=(grid_r,),
            in_specs=[pl.BlockSpec((tr, cols), lambda i: (i, 0))],
            out_specs=pl.BlockSpec((tr, cols), lambda i: (i, 0)),
        ),
        compiler_params=pltpu.CompilerParams(
            dimension_semantics=("parallel",),
            vmem_limit_bytes=vmem_limit,
        ),
        cost_estimate=cost,
        **extra_kwargs,
    )(x2d)

    return out2d.reshape(orig_shape)


if __name__ == "__main__":
    key = jax.random.PRNGKey(0)
    k1, k2, k3 = jax.random.split(key, 3)

    def ref_fn(x):
        return jnp.clip(
            jnp.exp(x.astype(jnp.float32)), _CLAMP_MIN, _CLAMP_MAX
        ).astype(x.dtype)

    # 1) Small module-like input (batch=2, ch=4, 16x16) -> tiny-array XLA path.
    x1 = jax.random.normal(k1, (2, 4, 16, 16), dtype=jnp.float32) * 5.0
    o1 = jax.block_until_ready(mean_act(x1))
    assert o1.shape == x1.shape and o1.dtype == x1.dtype
    assert jnp.allclose(o1, ref_fn(x1), rtol=1e-6, atol=1e-6)

    # 2) Typical (batch, genes) decoder output -> Pallas lane-dense path,
    #    copy-free reshape, grid >= 2 (both v7x TensorCores engaged).
    x2 = jax.random.normal(k2, (16, 2048), dtype=jnp.float32) * 5.0
    o2 = jax.block_until_ready(mean_act(x2, use_xla_fast_path=False))
    assert o2.shape == x2.shape and o2.dtype == x2.dtype
    assert jnp.allclose(o2, ref_fn(x2), rtol=1e-6, atol=1e-6)

    # 3) Ragged element count (n % 128 != 0) -> Pallas full-extent-lane path,
    #    no pad/slice HBM passes, partial last row-block masked by Pallas.
    x3 = jax.random.normal(k3, (3, 7, 19), dtype=jnp.float32) * 5.0
    o3 = jax.block_until_ready(mean_act(x3, use_xla_fast_path=False))
    assert o3.shape == x3.shape and o3.dtype == x3.dtype
    assert jnp.allclose(o3, ref_fn(x3), rtol=1e-6, atol=1e-6)

    print("KERNEL_OK")
</pallas_src>

<mosaic_0001>
module attributes {stable_mosaic.version = 11 : i64} {
  func.func @_mean_act_kernel(%arg0: i32, %arg1: memref<16x1024xf32, #tpu.memory_space<vmem>>, %arg2: memref<16x1024xf32, #tpu.memory_space<vmem>>) attributes {dimension_semantics = [#tpu.dimension_semantics<parallel>], iteration_bounds = array<i64: 2>, scalar_prefetch = 0 : i64, scratch_operands = 0 : i64, tpu.core_type = #tpu.core_type<tc>, window_params = [{transform_indices = @transform_0, window_bounds = array<i64: 16, 1024>}, {transform_indices = @transform_1, window_bounds = array<i64: 16, 1024>}]} {
    %c0 = arith.constant 0 : index
    %c0_0 = arith.constant 0 : index
    %0 = vector.load %arg1[%c0, %c0_0] : memref<16x1024xf32, #tpu.memory_space<vmem>>, vector<16x1024xf32>
    %1 = math.exp %0 : vector<16x1024xf32>
    %cst = arith.constant 9.99999974E-6 : f32
    %cst_1 = arith.constant 1.000000e+06 : f32
    %2 = vector.broadcast %cst : f32 to vector<16x1024xf32>
    %3 = arith.maximumf %2, %1 : vector<16x1024xf32>
    %4 = vector.broadcast %cst_1 : f32 to vector<16x1024xf32>
    %5 = arith.minimumf %4, %3 : vector<16x1024xf32>
    %c0_2 = arith.constant 0 : index
    %c0_3 = arith.constant 0 : index
    %6 = vector.load %arg2[%c0_2, %c0_3] : memref<16x1024xf32, #tpu.memory_space<vmem>>, vector<16x1024xf32>
    tpu.vector_store %arg2[%c0_2, %c0_3], %5 {strides = array<i32>} : memref<16x1024xf32, #tpu.memory_space<vmem>>, vector<16x1024xf32>,
    return
  }
  func.func @transform_0(%arg0: i32) -> (i32, i32) {
    %c0_i32 = arith.constant 0 : i32
    %c0_i32_0 = arith.constant 0 : i32
    return %arg0, %c0_i32 : i32, i32
  }
  func.func @transform_1(%arg0: i32) -> (i32, i32) {
    %c0_i32 = arith.constant 0 : i32
    %c0_i32_0 = arith.constant 0 : i32
    return %arg0, %c0_i32 : i32, i32
  }
}

</mosaic_0001>

<llo_original>
// kernel: tpu_custom_call.1
$region0: #{tpu_custom_call.1}
  #allocation0 [shape = 'u32[]', space=smem, size = 0x4, offset = 0x4, fixed_abs, tag = 'smem constant byte address 0x4 - core index']
  #allocation1 [shape = 'u32[144,128]{1,0:T(1,128)}', space=vmem, size = 0x12000, scoped, tag = 'internal scratch']
  %s0 = inlined_call_operand.hbm [shape: f32[32,1024], index: 0, kind: input, shape index: {}]
  %s1 = inlined_call_operand.hbm [shape: f32[32,1024], index: 1, kind: output, shape index: {}]
  %s2 = sld [smem:[#allocation0]]
  $region41: #{tpu_custom_call.1} parent=0
    _
  %s4 = ssub.s32 1, %s2
  %s5 = scalar_select 0, %s4, %s2
  $region1: #{tpu_custom_call.1} parent=0
    #allocation2 [shape = 'u8[131072]{0}', space=vmem, size = 0x20000, scoped, tag = 'input window, operand 0']
    #allocation3 [shape = 's32[2]{0}', space=sflag, size = 0x8, scoped, tag = 'scoped memory for tpu_custom_call.1']
    #allocation4 [shape = 's32[2]{0}', space=sflag, size = 0x8, scoped, tag = 'scoped memory for tpu_custom_call.1']
    #allocation5 [shape = 'u8[131072]{0}', space=vmem, size = 0x20000, scoped, tag = 'output window, operand 0']
    %6 = vsyncpa [#allocation3], 0
    %s7 = scalar_lea.sflag [#allocation3], 1
    %8 = vsyncpa %s7, 0
    %9 = vsyncpa [#allocation4], 0
    %s10 = scalar_lea.sflag [#allocation4], 1
    %11 = vsyncpa %s10, 0
    loop: start=0, step=1, limit=4
    $region2: #{tpu_custom_call.1} parent=1 // loop_pre_header
      _
    $region3: #{tpu_custom_call.1} parent=1 // loop_header
      %s13 = sphi 0, %s17
      %p14 = scmp.ge.s32.totalorder %s13, 4
      %s23 = sphi 0, %s25
      %s26 = sphi 0, %s23
      %s27 = sphi 0, %s26
      %s43 = sphi 0, %s27
      %s49 = sphi 0, %s51
      %s52 = sphi 0, %s49
      %s53 = sphi 0, %s52
      %s69 = sphi 0, %s53
    $region4: #{tpu_custom_call.1} parent=1 // loop_header_branch
      %16 = sbr.rel (%p14) target = $region8
    $region5: #{tpu_custom_call.1} parent=1 // loop_body
      %s18 = ssub.s32 %s13, 1
      %s19 = ssub.s32 %s13, 2
      %s20 = sadd.s32 %s13, 1
      %s21 = ssub.s32 %s13, %s20
      %p22 = scmp.eq.s32.totalorder %s21, 0
      %s24 = sadd.s32 %s23, 1
      %s25 = scalar_select %p22, %s23, %s24
      %p28 = pneg %p22
      %p29 = scmp.eq.s32.totalorder %s13, 1
      %p30 = por %p28, %p29
      %p31 = scmp.ne.s32.totalorder %s23, %s26
      %p32 = scmp.eq.s32.totalorder %s13, 0
      %p33 = por %p31, %p32
      %p34 = scmp.ne.s32.totalorder %s23, %s26
      %p35 = scmp.eq.s32.totalorder %s18, 1
      %p36 = por %p34, %p35
      %p37 = scmp.ne.s32.totalorder %s26, %s27
      %p38 = scmp.eq.s32.totalorder %s18, 0
      %p39 = por %p37, %p38
      %p40 = scmp.ne.s32.totalorder %s26, %s27
      %p41 = scmp.eq.s32.totalorder %s19, 1
      %p42 = por %p40, %p41
      %p44 = scmp.ne.s32.totalorder %s27, %s43
      %p45 = scmp.eq.s32.totalorder %s19, 0
      %p46 = por %p44, %p45
      %s47 = ssub.s32 %s13, %s20
      %p48 = scmp.eq.s32.totalorder %s47, 0
      %s50 = sadd.s32 %s49, 1
      %s51 = scalar_select %p48, %s49, %s50
      %p54 = pneg %p48
      %p55 = scmp.eq.s32.totalorder %s13, 1
      %p56 = por %p54, %p55
      %p57 = scmp.ne.s32.totalorder %s49, %s52
      %p58 = scmp.eq.s32.totalorder %s13, 0
      %p59 = por %p57, %p58
      %p60 = scmp.ne.s32.totalorder %s49, %s52
      %p61 = scmp.eq.s32.totalorder %s18, 1
      %p62 = por %p60, %p61
      %p63 = scmp.ne.s32.totalorder %s52, %s53
      %p64 = scmp.eq.s32.totalorder %s18, 0
      %p65 = por %p63, %p64
      %p66 = scmp.ne.s32.totalorder %s52, %s53
      %p67 = scmp.eq.s32.totalorder %s19, 1
      %p68 = por %p66, %p67
      %p70 = scmp.ne.s32.totalorder %s53, %s69
      %p71 = scmp.eq.s32.totalorder %s19, 0
      %p72 = por %p70, %p71
      %p73 = scmp.le.s32.totalorder 1, %s13
      %p74 = scmp.lt.s32.totalorder %s13, 3
      %p75 = pnand %p73, %p74
      %p76 = pneg %p75
      // Predicated region
      $region9: #{tpu_custom_call.1} parent=5 // pred_check
        _
      $region10: #{tpu_custom_call.1} parent=5 // pred_check_branch
        %78 = sbr.rel (%p75) target = $region12
      $region11: #{tpu_custom_call.1} parent=5 // pred_region
        %s79 = ssub.s32 %s13, 1
      $region12: #{tpu_custom_call.1} parent=5 // pred_fallthru
        _
      %p80 = scmp.lt.s32.totalorder %s13, 2
      // Predicated region
      $region13: #{tpu_custom_call.1} parent=5 // pred_check
        %p81 = pneg %p80
      $region14: #{tpu_custom_call.1} parent=5 // pred_check_branch
        %83 = sbr.rel (%p81) target = $region16
      $region15: #{tpu_custom_call.1} parent=5 // pred_region
        // Predicated region
        $region17: #{tpu_custom_call.1} parent=15 // pred_check
          %p84 = pneg %p33
        $region18: #{tpu_custom_call.1} parent=15 // pred_check_branch
          %86 = sbr.rel (%p84) target = $region20
        $region19: #{tpu_custom_call.1} parent=15 // pred_region
          %s87 = sand.u32 %s23, 1
          %s88 = scalar_lea.sflag [#allocation3], %s87
          %s89 = sand.u32 %s23, 1
          %s90 = smul.addr %s89, 128
          %s91 = scalar_lea.vmem [#allocation2], %s90
          %s92 = smul.u32 2, %s13
          %s94 = ssub.s32 2048, 2048
          %95 = vsyncadd %s88, %s94
          %s96 = smul.addr %s92, 8
          %s97 = smul.addr %s96, 128
          %s98 = scalar_lea.hbm %s0, %s97
          %s99 = sshll.u32 %s91, 4
          %s100 = int_to_ptr.vmem [resolvable:$true] %s99
          %105 = dma.hbm_to_vmem [thread:$0]  %s98, 2048, %s100, %s88, 1024, 1024, 64
        $region20: #{tpu_custom_call.1} parent=15 // pred_fallthru
          _
      $region16: #{tpu_custom_call.1} parent=5 // pred_fallthru
        _
      %p106 = scmp.le.s32.totalorder 1, %s13
      %p107 = scmp.lt.s32.totalorder %s13, 3
      %p108 = pnand %p106, %p107
      %p109 = pneg %p108
      // Predicated region
      $region21: #{tpu_custom_call.1} parent=5 // pred_check
        _
      $region22: #{tpu_custom_call.1} parent=5 // pred_check_branch
        %111 = sbr.rel (%p108) target = $region24
      $region23: #{tpu_custom_call.1} parent=5 // pred_region
        %s112 = ssub.s32 %s13, 1
        %s113 = sand.u32 %s26, 1
        %s114 = scalar_lea.sflag [#allocation3], %s113
        %s115 = sand.u32 %s26, 1
        %s116 = smul.addr %s115, 128
        %s117 = scalar_lea.vmem [#allocation2], %s116
        // Predicated region
        $region25: #{tpu_custom_call.1} parent=23 // pred_check
          %p118 = pneg %p39
        $region26: #{tpu_custom_call.1} parent=23 // pred_check_branch
          %120 = sbr.rel (%p118) target = $region28
        $region27: #{tpu_custom_call.1} parent=23 // pred_region
          %121 = dma.done %s114, 2048
        $region28: #{tpu_custom_call.1} parent=23 // pred_fallthru
          _
        %s122 = sand.u32 %s26, 1
        %s123 = scalar_lea.sflag [#allocation3], %s122
        %s124 = sand.u32 %s26, 1
        %s125 = smul.addr %s124, 128
        %s126 = scalar_lea.vmem [#allocation2], %s125
        %p127 = pneg %p39
        %p128 = pneg %p36
        %p129 = pneg %p65
        %p130 = pneg %p62
        %s131 = sand.u32 %s52, 1
        %s132 = scalar_lea.sflag [#allocation4], %s131
        %s133 = sand.u32 %s52, 1
        %s134 = smul.addr %s133, 128
        %s135 = scalar_lea.vmem [#allocation5], %s134
        %s136 = smul.u32 2, %s18
        %s137 = smul.u32 2, %s18
        %v138 = vld [vmem:[%s117] sm:$0xff]
        %v139 = vld [vmem:[%s117 + $0x8] sm:$0xff]
        %v140 = vld [vmem:[%s117 + $0x10] sm:$0xff]
        %v141 = vld [vmem:[%s117 + $0x18] sm:$0xff]
        %v142 = vld [vmem:[%s117 + $0x20] sm:$0xff]
        %v143 = vld [vmem:[%s117 + $0x28] sm:$0xff]
        %v144 = vld [vmem:[%s117 + $0x30] sm:$0xff]
        %v145 = vld [vmem:[%s117 + $0x38] sm:$0xff]
        %v146 = vld [vmem:[%s117 + $0x40] sm:$0xff]
        %v147 = vld [vmem:[%s117 + $0x48] sm:$0xff]
        %v148 = vld [vmem:[%s117 + $0x50] sm:$0xff]
        %v149 = vld [vmem:[%s117 + $0x58] sm:$0xff]
        %v150 = vld [vmem:[%s117 + $0x60] sm:$0xff]
        %v151 = vld [vmem:[%s117 + $0x68] sm:$0xff]
        %v152 = vld [vmem:[%s117 + $0x70] sm:$0xff]
        %v153 = vld [vmem:[%s117 + $0x78] sm:$0xff]
        %v154 = vmul.f32 %v138, 1.442695
        %v155 = vpow.pop %v154
        %v156 = vmul.f32 %v139, 1.442695
        %v157 = vpow.pop %v156
        %v158 = vmul.f32 %v140, 1.442695
        %v159 = vpow.pop %v158
        %v160 = vmul.f32 %v141, 1.442695
        %v161 = vpow.pop %v160
        %v162 = vmul.f32 %v142, 1.442695
        %v163 = vpow.pop %v162
        %v164 = vmul.f32 %v143, 1.442695
        %v165 = vpow.pop %v164
        %v166 = vmul.f32 %v144, 1.442695
        %v167 = vpow.pop %v166
        %v168 = vmul.f32 %v145, 1.442695
        %v169 = vpow.pop %v168
        %v170 = vmul.f32 %v146, 1.442695
        %v171 = vpow.pop %v170
        %v172 = vmul.f32 %v147, 1.442695
        %v173 = vpow.pop %v172
        %v174 = vmul.f32 %v148, 1.442695
        %v175 = vpow.pop %v174
        %v176 = vmul.f32 %v149, 1.442695
        %v177 = vpow.pop %v176
        %v178 = vmul.f32 %v150, 1.442695
        %v179 = vpow.pop %v178
        %v180 = vmul.f32 %v151, 1.442695
        %v181 = vpow.pop %v180
        %v182 = vmul.f32 %v152, 1.442695
        %v183 = vpow.pop %v182
        %v184 = vmul.f32 %v153, 1.442695
        %v185 = vpow.pop %v184
        %v186 = vmax.f32 %v155, 1e-05
        %v187 = vmax.f32 %v157, 1e-05
        %v188 = vmax.f32 %v159, 1e-05
        %v189 = vmax.f32 %v161, 1e-05
        %v190 = vmax.f32 %v163, 1e-05
        %v191 = vmax.f32 %v165, 1e-05
        %v192 = vmax.f32 %v167, 1e-05
        %v193 = vmax.f32 %v169, 1e-05
        %v194 = vmax.f32 %v171, 1e-05
        %v195 = vmax.f32 %v173, 1e-05
        %v196 = vmax.f32 %v175, 1e-05
        %v197 = vmax.f32 %v177, 1e-05
        %v198 = vmax.f32 %v179, 1e-05
        %v199 = vmax.f32 %v181, 1e-05
        %v200 = vmax.f32 %v183, 1e-05
        %v201 = vmax.f32 %v185, 1e-05
        %v202 = vmin.f32 %v186, 1000000.0
        %v203 = vmin.f32 %v187, 1000000.0
        %v204 = vmin.f32 %v188, 1000000.0
        %v205 = vmin.f32 %v189, 1000000.0
        %v206 = vmin.f32 %v190, 1000000.0
        %v207 = vmin.f32 %v191, 1000000.0
        %v208 = vmin.f32 %v192, 1000000.0
        %v209 = vmin.f32 %v193, 1000000.0
        %v210 = vmin.f32 %v194, 1000000.0
        %v211 = vmin.f32 %v195, 1000000.0
        %v212 = vmin.f32 %v196, 1000000.0
        %v213 = vmin.f32 %v197, 1000000.0
        %v214 = vmin.f32 %v198, 1000000.0
        %v215 = vmin.f32 %v199, 1000000.0
        %v216 = vmin.f32 %v200, 1000000.0
        %v217 = vmin.f32 %v201, 1000000.0
        %218 = vst [vmem:[%s135] sm:$0xff] %v202
        %219 = vst [vmem:[%s135 + $0x8] sm:$0xff] %v203
        %220 = vst [vmem:[%s135 + $0x10] sm:$0xff] %v204
        %221 = vst [vmem:[%s135 + $0x18] sm:$0xff] %v205
        %222 = vst [vmem:[%s135 + $0x20] sm:$0xff] %v206
        %223 = vst [vmem:[%s135 + $0x28] sm:$0xff] %v207
        %224 = vst [vmem:[%s135 + $0x30] sm:$0xff] %v208
        %225 = vst [vmem:[%s135 + $0x38] sm:$0xff] %v209
        %226 = vst [vmem:[%s135 + $0x40] sm:$0xff] %v210
        %227 = vst [vmem:[%s135 + $0x48] sm:$0xff] %v211
        %228 = vst [vmem:[%s135 + $0x50] sm:$0xff] %v212
        %229 = vst [vmem:[%s135 + $0x58] sm:$0xff] %v213
        %230 = vst [vmem:[%s135 + $0x60] sm:$0xff] %v214
        %231 = vst [vmem:[%s135 + $0x68] sm:$0xff] %v215
        %232 = vst [vmem:[%s135 + $0x70] sm:$0xff] %v216
        %233 = vst [vmem:[%s135 + $0x78] sm:$0xff] %v217
        %s234 = sand.u32 %s52, 1
        %s235 = scalar_lea.sflag [#allocation4], %s234
        %s236 = sand.u32 %s52, 1
        %s237 = smul.addr %s236, 128
        %s238 = scalar_lea.vmem [#allocation5], %s237
        // Predicated region
        $region29: #{tpu_custom_call.1} parent=23 // pred_check
          %p239 = pneg %p62
        $region30: #{tpu_custom_call.1} parent=23 // pred_check_branch
          %241 = sbr.rel (%p239) target = $region32
        $region31: #{tpu_custom_call.1} parent=23 // pred_region
          %s242 = smul.u32 2, %s18
          %s244 = ssub.s32 2048, 2048
          %245 = vsyncadd %s235, %s244
          %s246 = smul.addr %s242, 8
          %s247 = smul.addr %s246, 128
          %s248 = scalar_lea.hbm %s1, %s247
          %s249 = sshll.u32 %s238, 4
          %s250 = int_to_ptr.vmem [resolvable:$true] %s249
          %255 = dma.vmem_to_hbm [thread:$0]  %s250, 2048, %s248, %s235, 1024, 1024, 64
        $region32: #{tpu_custom_call.1} parent=23 // pred_fallthru
          _
      $region24: #{tpu_custom_call.1} parent=5 // pred_fallthru
        _
      %p256 = scmp.le.s32.totalorder 2, %s13
      // Predicated region
      $region33: #{tpu_custom_call.1} parent=5 // pred_check
        %p257 = pneg %p256
      $region34: #{tpu_custom_call.1} parent=5 // pred_check_branch
        %259 = sbr.rel (%p257) target = $region36
      $region35: #{tpu_custom_call.1} parent=5 // pred_region
        %s260 = ssub.s32 %s13, 2
        // Predicated region
        $region37: #{tpu_custom_call.1} parent=35 // pred_check
          %p261 = pneg %p68
        $region38: #{tpu_custom_call.1} parent=35 // pred_check_branch
          %263 = sbr.rel (%p261) target = $region40
        $region39: #{tpu_custom_call.1} parent=35 // pred_region
          %s264 = sand.u32 %s53, 1
          %s265 = scalar_lea.sflag [#allocation4], %s264
          %s266 = sand.u32 %s53, 1
          %s267 = smul.addr %s266, 128
          %s268 = scalar_lea.vmem [#allocation5], %s267
          %269 = dma.done %s265, 2048
        $region40: #{tpu_custom_call.1} parent=35 // pred_fallthru
          _
      $region36: #{tpu_custom_call.1} parent=5 // pred_fallthru
        _
    $region6: #{tpu_custom_call.1} parent=1 // loop_footer
      %s17 = sadd.s32 1, %s13
    $region7: #{tpu_custom_call.1} parent=1 // loop_footer_branch
      %12 = sbr.rel target = $region3
    $region8: #{tpu_custom_call.1} parent=1 // loop_exit
      _
    %270 = vsyncpa [#allocation3], 1
    %s271 = scalar_lea.sflag [#allocation3], 1
    %272 = vsyncpa %s271, 1
    %273 = vsyncpa [#allocation4], 1
    %s274 = scalar_lea.sflag [#allocation4], 1
    %275 = vsyncpa %s274, 1

</llo_original>
